<compile_context>
chip_gen: v7x
topology: tpu7x:2x2x1
jax: 0.10.0
libtpu: 0.0.40
codegen_flags: <defaults>
</compile_context>

<pallas_src>
import functools

import numpy as np
import jax
import jax.numpy as jnp
from jax.experimental import pallas as pl
from jax.experimental.pallas import tpu as pltpu


def _round_up(v, m):
    return (v + m - 1) // m * m


def _pad_rows(x, mp):
    m = x.shape[0]
    if mp == m:
        return x
    return jnp.pad(x, ((0, mp - m),) + ((0, 0),) * (x.ndim - 1))


def _row_tile(m, c, n_arrays, budget=12 << 20):
    """Row tile (multiple of 8) so ~n_arrays (t, c) f32 blocks fit in `budget` bytes."""
    per_row = max(1, n_arrays * c * 4)
    t = max(8, min(2048, (budget // per_row) // 8 * 8))
    mp8 = _round_up(max(m, 1), 8)
    if mp8 <= t:
        return mp8, mp8
    return t, _round_up(m, t)


def _apply_tile(mp, c, n_arrays, budget=12 << 20):
    """Row tile that exactly divides an already-padded Mp (Mp is a multiple of 8)."""
    cap = max(8, (budget // max(1, n_arrays * c * 4)) // 8 * 8)
    if mp <= cap:
        return mp
    for t in (2048, 1024, 512, 256, 128, 64, 32, 16, 8):
        if t <= cap and mp % t == 0:
            return t
    return mp


# ----------------------------------------------------------------------------
# Matmul (MXU, bf16 operands, f32 accumulation) with fused BN partial statistics
# ----------------------------------------------------------------------------
def _matmul_stats_kernel(x_ref, w_ref, o_ref, s_ref, s2_ref):
    acc = jnp.dot(x_ref[...], w_ref[...], preferred_element_type=jnp.float32)
    o_ref[...] = acc.astype(o_ref.dtype)
    # per-(M tile, N tile) partial column sums; reduced over M tiles in XLA (tiny).
    s_ref[0] = jnp.sum(acc, axis=0, keepdims=True)
    s2_ref[0] = jnp.sum(acc * acc, axis=0, keepdims=True)


def matmul_bn_stats(x, w, out_dtype=jnp.bfloat16):
    """x: (M, K), w: (K, N) -> (out (Mp, N), sum (1, N), sumsq (1, N), Mp).

    Full-K blocks (K <= 2048 everywhere), N tile is the full (possibly
    non-128-aligned) N or a 128-multiple divisor of N, so no K/N padding is ever
    materialized; only M is zero-padded (padded rows contribute 0 to the stats).
    Weights stream over the inner N-tile axis while the activation block stays
    VMEM-resident; both grid axes are parallel (no accumulator residency needed
    because stats are emitted as per-tile partial sums).
    """
    M, K = x.shape
    K2, N = w.shape
    assert K == K2
    xb = x if x.dtype == jnp.bfloat16 else x.astype(jnp.bfloat16)
    wb = w if w.dtype == jnp.bfloat16 else w.astype(jnp.bfloat16)

    if N % 128 != 0 or N <= 512:
        tn = N
    else:
        tn = next(t for t in (512, 384, 256, 128) if N % t == 0)

    mp8 = _round_up(M, 8)
    if mp8 <= 512:
        tm, Mp = mp8, mp8
    else:
        tm = 512 if M >= 2048 else 256
        Mp = _round_up(M, tm)
    xb = _pad_rows(xb, Mp)
    gm, gn = Mp // tm, N // tn

    out, s, s2 = pl.pallas_call(
        _matmul_stats_kernel,
        out_shape=(jax.ShapeDtypeStruct((Mp, N), out_dtype),
                   jax.ShapeDtypeStruct((gm, 1, N), jnp.float32),
                   jax.ShapeDtypeStruct((gm, 1, N), jnp.float32)),
        grid=(gm, gn),
        in_specs=[pl.BlockSpec((tm, K), lambda i, j: (i, 0)),
                  pl.BlockSpec((K, tn), lambda i, j: (0, j))],
        out_specs=(pl.BlockSpec((tm, tn), lambda i, j: (i, j)),
                   pl.BlockSpec((1, 1, tn), lambda i, j: (i, 0, j)),
                   pl.BlockSpec((1, 1, tn), lambda i, j: (i, 0, j))),
        compiler_params=pltpu.CompilerParams(
            dimension_semantics=("parallel", "parallel")),
    )(xb, wb)
    return out, jnp.sum(s, axis=0), jnp.sum(s2, axis=0), Mp


# ----------------------------------------------------------------------------
# BatchNorm2d apply (training-mode batch statistics), fused ReLU / residual add
# ----------------------------------------------------------------------------
def _bn_apply_kernel(*refs, relu, has_res):
    if has_res:
        x_ref, sc_ref, sh_ref, r_ref, o_ref = refs
    else:
        x_ref, sc_ref, sh_ref, o_ref = refs
        r_ref = None
    y = x_ref[...].astype(jnp.float32) * sc_ref[...] + sh_ref[...]
    if r_ref is not None:
        y = y + r_ref[...].astype(jnp.float32)
    if relu:
        y = jnp.maximum(y, 0.0)
    o_ref[...] = y.astype(o_ref.dtype)


def bn_apply_flat(x_p, stats, count, bn, *, relu=False, residual_p=None,
                  out_dtype=jnp.bfloat16, eps=1e-5):
    """y = BN(x) [+ residual] [-> ReLU] on a padded flat (Mp, C) activation."""
    s, s2 = stats
    mean = s / count
    var = jnp.maximum(s2 / count - mean * mean, 0.0)      # biased variance
    scale = bn["gamma"] * jax.lax.rsqrt(var + eps)
    shift = bn["beta"] - mean * scale

    Mp, C = x_p.shape
    has_res = residual_p is not None
    tm = _apply_tile(Mp, C, 3 if has_res else 2)
    args = [x_p, scale, shift]
    in_specs = [pl.BlockSpec((tm, C), lambda i: (i, 0)),
                pl.BlockSpec((1, C), lambda i: (0, 0)),
                pl.BlockSpec((1, C), lambda i: (0, 0))]
    if has_res:
        args.append(residual_p)
        in_specs.append(pl.BlockSpec((tm, C), lambda i: (i, 0)))
    return pl.pallas_call(
        functools.partial(_bn_apply_kernel, relu=relu, has_res=has_res),
        out_shape=jax.ShapeDtypeStruct((Mp, C), out_dtype),
        grid=(Mp // tm,),
        in_specs=in_specs,
        out_specs=pl.BlockSpec((tm, C), lambda i: (i, 0)),
        compiler_params=pltpu.CompilerParams(dimension_semantics=("parallel",)),
    )(*args)


def _flat_conv_bn(x_flat, M, w, bn, *, relu=False, residual_flat=None,
                  out_dtype=jnp.bfloat16):
    """matmul (fused stats) -> BN apply, staying in padded (Mp, C) layout throughout."""
    out_p, s, s2, Mp = matmul_bn_stats(x_flat, w)
    res_p = _pad_rows(residual_flat, Mp) if residual_flat is not None else None
    y_p = bn_apply_flat(out_p, (s, s2), M, bn, relu=relu, residual_p=res_p,
                        out_dtype=out_dtype)
    return y_p[:M] if Mp != M else y_p


# ----------------------------------------------------------------------------
# Depthwise 3x3 conv (windowed, halo-padded image per grid step, bf16 in/out)
# ----------------------------------------------------------------------------
def _depthwise_kernel(x_ref, w_ref, *rest, H, W, relu_input, has_add):
    if has_add:
        a_ref, o_ref = rest
    else:
        (o_ref,) = rest
    xp = x_ref[0].astype(jnp.float32)           # (H+2, W+2, C), VMEM-resident
    if relu_input:
        xp = jnp.maximum(xp, 0.0)               # pre-activation ReLU (pad zeros stay 0)
    w = w_ref[...]                              # (9, 1, C) f32
    acc = None
    for k in range(9):
        dy, dx = k // 3, k % 3
        term = xp[dy:dy + H, dx:dx + W, :] * w[k]
        acc = term if acc is None else acc + term
    if has_add:
        acc = acc + a_ref[0].astype(jnp.float32)   # fused elementwise add (y + hp(x))
    o_ref[0] = acc.astype(o_ref.dtype)


def depthwise3x3(x, w, relu_input=False, add=None):
    """Depthwise 3x3 conv, stride 1, padding 1.  x: NHWC bf16, w: (3, 3, C) f32."""
    # TODO(synk): for very large spatial sizes on v7x, row-tile the halo window
    # instead of one whole padded image per grid step (bf16 keeps this well under
    # VMEM at ImageNet-scale resolutions).
    N, H, W, C = x.shape
    xp = jnp.pad(x, ((0, 0), (1, 1), (1, 1), (0, 0)))
    wf = w.reshape(9, 1, C).astype(jnp.float32)
    args = [xp, wf]
    in_specs = [pl.BlockSpec((1, H + 2, W + 2, C), lambda n: (n, 0, 0, 0)),
                pl.BlockSpec((9, 1, C), lambda n: (0, 0, 0))]
    if add is not None:
        args.append(add)
        in_specs.append(pl.BlockSpec((1, H, W, C), lambda n: (n, 0, 0, 0)))
    return pl.pallas_call(
        functools.partial(_depthwise_kernel, H=H, W=W,
                          relu_input=relu_input, has_add=add is not None),
        out_shape=jax.ShapeDtypeStruct((N, H, W, C), jnp.bfloat16),
        grid=(N,),
        in_specs=in_specs,
        out_specs=pl.BlockSpec((1, H, W, C), lambda n: (n, 0, 0, 0)),
        compiler_params=pltpu.CompilerParams(dimension_semantics=("parallel",)),
    )(*args)


# ----------------------------------------------------------------------------
# MaxPool2d(3, stride=2, padding=1): strided output computed directly from
# even/odd phase-split inputs (all in-kernel taps are contiguous slices).
# ----------------------------------------------------------------------------
def _maxpool_s2_kernel(ee_ref, eo_ref, oe_ref, oo_ref, o_ref, *, Ho, Wo):
    ee, eo, oe, oo = ee_ref[0], eo_ref[0], oe_ref[0], oo_ref[0]
    phase = ((ee, eo), (oe, oo))
    m = None
    for dy in range(3):
        for dx in range(3):
            ph = phase[dy % 2][dx % 2]
            t = ph[dy // 2:dy // 2 + Ho, dx // 2:dx // 2 + Wo, :]
            m = t if m is None else jnp.maximum(m, t)
    o_ref[0] = m.astype(o_ref.dtype)


def maxpool3x3_s2(x):
    """MaxPool2d(kernel=3, stride=2, padding=1) on NHWC bf16, strided output only."""
    N, H, W, C = x.shape
    Ho = (H - 1) // 2 + 1
    Wo = (W - 1) // 2 + 1
    xp = jnp.pad(x, ((0, 0), (1, 1), (1, 1), (0, 0)), constant_values=-jnp.inf)
    phases = [xp[:, dy::2, dx::2, :] for dy in (0, 1) for dx in (0, 1)]
    in_specs = [pl.BlockSpec((1,) + ph.shape[1:], lambda n: (n, 0, 0, 0))
                for ph in phases]
    return pl.pallas_call(
        functools.partial(_maxpool_s2_kernel, Ho=Ho, Wo=Wo),
        out_shape=jax.ShapeDtypeStruct((N, Ho, Wo, C), x.dtype),
        grid=(N,),
        in_specs=in_specs,
        out_specs=pl.BlockSpec((1, Ho, Wo, C), lambda n: (n, 0, 0, 0)),
        compiler_params=pltpu.CompilerParams(dimension_semantics=("parallel",)),
    )(*phases)


# ----------------------------------------------------------------------------
# Elementwise kernels (row-tiled, lane-dense (tm, C) blocks)
# ----------------------------------------------------------------------------
def _add_kernel(a_ref, b_ref, o_ref):
    o_ref[...] = (a_ref[...].astype(jnp.float32)
                  + b_ref[...].astype(jnp.float32)).astype(o_ref.dtype)


def pallas_add(a, b, out_dtype=jnp.float32):
    shape = a.shape
    C = shape[-1]
    M = int(np.prod(shape[:-1]))
    tm, Mp = _row_tile(M, C, 3)
    out = pl.pallas_call(
        _add_kernel,
        out_shape=jax.ShapeDtypeStruct((Mp, C), out_dtype),
        grid=(Mp // tm,),
        in_specs=[pl.BlockSpec((tm, C), lambda i: (i, 0)),
                  pl.BlockSpec((tm, C), lambda i: (i, 0))],
        out_specs=pl.BlockSpec((tm, C), lambda i: (i, 0)),
        compiler_params=pltpu.CompilerParams(dimension_semantics=("parallel",)),
    )(_pad_rows(a.reshape(M, C), Mp), _pad_rows(b.reshape(M, C), Mp))
    if Mp != M:
        out = out[:M]
    return out.reshape(shape)


def _pag_fuse_kernel(x_ref, y_ref, xk_ref, yq_ref, o_ref):
    x = x_ref[...].astype(jnp.float32)
    y = y_ref[...].astype(jnp.float32)
    xk = xk_ref[...].astype(jnp.float32)
    yq = yq_ref[...].astype(jnp.float32)
    sim = jax.nn.sigmoid(jnp.sum(xk * yq, axis=-1, keepdims=True))
    # PagFM output (with_channel=False) fused with the outer residual x + pag(x, y).
    o_ref[...] = (x + (1.0 - sim) * x + sim * y).astype(o_ref.dtype)


def _relu_mean_kernel(x_ref, o_ref):
    x = jnp.maximum(x_ref[...], 0.0)                 # (N, S, C)
    o_ref[...] = jnp.mean(x, axis=1)                 # adaptive_avg_pool2d to (1, 1)


# ----------------------------------------------------------------------------
# Composite ops (JAX glue around the kernels above)
# ----------------------------------------------------------------------------
def conv3x3_bn(x, w, bn, *, stride=1, relu=False):
    """Dense 3x3 conv (padding 0) via im2col + matmul with fused BN stats, then BN."""
    # TODO(synk): replace the XLA im2col with a windowed dense-conv Pallas kernel for
    # the widest entry-flow stage (9x patch materialization); kept as im2col here.
    N, H, W, C = x.shape
    kh, kw, _, Cout = w.shape
    Ho = (H - kh) // stride + 1
    Wo = (W - kw) // stride + 1
    cols = [x[:, dy:dy + (Ho - 1) * stride + 1:stride,
              dx:dx + (Wo - 1) * stride + 1:stride, :]
            for dy in range(kh) for dx in range(kw)]
    pat = jnp.concatenate(cols, axis=-1).reshape(N * Ho * Wo, kh * kw * C)
    M = N * Ho * Wo
    y = _flat_conv_bn(pat, M, w.reshape(kh * kw * C, Cout), bn, relu=relu)
    return y.reshape(N, Ho, Wo, Cout)


def conv1x1_bn(x, w, bn, *, relu=False, residual=None, stride=1):
    if stride != 1:
        # TODO(synk): fold the stride-2 subsample into the matmul BlockSpec instead
        # of an XLA strided gather.
        x = x[:, ::stride, ::stride, :]
    N, H, W, C = x.shape
    Cout = w.shape[-1]
    M = N * H * W
    res_flat = residual.reshape(M, Cout) if residual is not None else None
    y = _flat_conv_bn(x.reshape(M, C), M, w, bn, relu=relu, residual_flat=res_flat)
    return y.reshape(N, H, W, Cout)


def sepconv_bn(x, sep, bn, *, pre_relu=False, relu=False, residual=None):
    """SeparableConv2d(3x3, pad 1) + BN [+ residual] [+ ReLU], pre-ReLU fused in dw."""
    h = depthwise3x3(x, sep["dw"], relu_input=pre_relu)
    N, H, W, C = h.shape
    Cout = sep["pw"].shape[-1]
    M = N * H * W
    res_flat = residual.reshape(M, Cout) if residual is not None else None
    y = _flat_conv_bn(h.reshape(M, C), M, sep["pw"], bn, relu=relu,
                      residual_flat=res_flat)
    return y.reshape(N, H, W, Cout)


def block_forward(x, p):
    out = x
    units = p["units"]
    stride = p["stride"]
    skip_p = p["skip"]
    fuse_res_last_bn = (stride == 1 and skip_p is None)
    for idx, u in enumerate(units):
        res = x if (fuse_res_last_bn and idx == len(units) - 1) else None
        out = sepconv_bn(out, u["sep"], u["bn"], pre_relu=u["pre_relu"],
                         residual=res)                # residual add fused into BN
    if stride != 1:
        out = maxpool3x3_s2(out)
    if skip_p is not None:
        out = conv1x1_bn(x, skip_p["w"], skip_p["bn"], stride=stride,
                         residual=out)                # BN(skip) + out fused
    elif not fuse_res_last_bn:
        out = pallas_add(out, x, out_dtype=out.dtype)
    return out


def pag_fm_residual(x, y, p):
    # PagFM(after_relu=False, with_channel=False) fused with `x = x + pag(x, y)`.
    # F.interpolate(..., size=x.shape[2:], align_corners=False) is an identity here
    # because the two streams have identical spatial sizes at the fusion points.
    yq = conv1x1_bn(y, p["f_y_w"], p["f_y_bn"])
    xk = conv1x1_bn(x, p["f_x_w"], p["f_x_bn"])
    N, H, W, C = x.shape
    Cm = xk.shape[-1]
    M = N * H * W
    tm, Mp = _row_tile(M, C, 6)
    out = pl.pallas_call(
        _pag_fuse_kernel,
        out_shape=jax.ShapeDtypeStruct((Mp, C), x.dtype),
        grid=(Mp // tm,),
        in_specs=[pl.BlockSpec((tm, C), lambda i: (i, 0)),
                  pl.BlockSpec((tm, C), lambda i: (i, 0)),
                  pl.BlockSpec((tm, Cm), lambda i: (i, 0)),
                  pl.BlockSpec((tm, Cm), lambda i: (i, 0))],
        out_specs=pl.BlockSpec((tm, C), lambda i: (i, 0)),
        compiler_params=pltpu.CompilerParams(dimension_semantics=("parallel",)),
    )(_pad_rows(x.reshape(M, C), Mp), _pad_rows(y.reshape(M, C), Mp),
      _pad_rows(xk.reshape(M, Cm), Mp), _pad_rows(yq.reshape(M, Cm), Mp))
    if Mp != M:
        out = out[:M]
    return out.reshape(N, H, W, C)


# ----------------------------------------------------------------------------
# Deterministic parameter construction (mirrors the module's __init__ shapes)
# ----------------------------------------------------------------------------
class ParamGen:
    def __init__(self, key):
        self._key = key

    def normal(self, shape, scale=0.05):
        self._key, sub = jax.random.split(self._key)
        return scale * jax.random.normal(sub, shape, dtype=jnp.float32)


def init_bn(c):
    return {"gamma": jnp.ones((1, c), jnp.float32),
            "beta": jnp.zeros((1, c), jnp.float32)}


def init_sep(pg, cin, cout):
    # pointwise weights pre-cast to bf16 (MXU native); depthwise stays f32 (VPU).
    return {"dw": pg.normal((3, 3, cin)),
            "pw": pg.normal((cin, cout)).astype(jnp.bfloat16)}


def init_block(pg, inf, outf, reps, strides, start_with_relu=True, grow_first=True):
    units = []
    filters = inf
    if grow_first:
        units.append({"pre_relu": True, "sep": init_sep(pg, inf, outf), "bn": init_bn(outf)})
        filters = outf
    for _ in range(reps - 1):
        units.append({"pre_relu": True, "sep": init_sep(pg, filters, filters), "bn": init_bn(filters)})
    if not grow_first:
        units.append({"pre_relu": True, "sep": init_sep(pg, inf, outf), "bn": init_bn(outf)})
    if not start_with_relu:
        units[0]["pre_relu"] = False
    skip = None
    if outf != inf or strides != 1:
        skip = {"w": pg.normal((inf, outf)).astype(jnp.bfloat16), "bn": init_bn(outf)}
    return {"units": units, "stride": strides, "skip": skip}


def init_pag(pg, cin, cmid):
    return {"f_x_w": pg.normal((cin, cmid)).astype(jnp.bfloat16), "f_x_bn": init_bn(cmid),
            "f_y_w": pg.normal((cin, cmid)).astype(jnp.bfloat16), "f_y_bn": init_bn(cmid)}


def high_pass_kernel(kernel_size, sigma, channels):
    # Exactly GaussianFilter.create_high_pass_kernel, replicated per channel (3, 3, C).
    kernel = np.zeros((kernel_size, kernel_size))
    pad = kernel_size // 2
    for xx in range(-pad, -pad + kernel_size):
        for yy in range(-pad, -pad + kernel_size):
            kernel[yy + pad, xx + pad] = np.exp(-(xx ** 2 + yy ** 2) / (2 * sigma ** 2))
    kernel /= sigma ** 2 * np.pi * 2
    kernel /= kernel.sum()
    identity = np.zeros((kernel_size, kernel_size))
    identity[pad, pad] = 1
    hp = identity - kernel
    hp /= -hp[pad, pad]
    return jnp.asarray(np.repeat(hp[:, :, None], channels, axis=2), dtype=jnp.float32)


_BLOCK_SPECS = ([(64, 128, 2, 2, False, True),
                 (128, 256, 2, 2, True, True),
                 (256, 728, 2, 2, True, True)]
                + [(728, 728, 3, 1, True, True)] * 8
                + [(728, 1024, 2, 2, True, False)])


def init_xception_params(key, inc=3, num_classes=2):
    pg = ParamGen(key)
    p = {}
    # main (x) stream
    p["conv1_w"] = pg.normal((3, 3, inc, 32)).astype(jnp.bfloat16); p["bn1"] = init_bn(32)
    p["conv2_w"] = pg.normal((3, 3, 32, 64)).astype(jnp.bfloat16);  p["bn2"] = init_bn(64)
    p["blocks"] = [init_block(pg, *s) for s in _BLOCK_SPECS]
    p["conv3"] = init_sep(pg, 1024, 1536); p["bn3"] = init_bn(1536)
    p["conv4"] = init_sep(pg, 1536, 2048); p["bn4"] = init_bn(2048)
    # secondary (y, "s") stream
    p["conv1s_w"] = pg.normal((3, 3, inc, 32)).astype(jnp.bfloat16); p["bn1s"] = init_bn(32)
    p["conv2s_w"] = pg.normal((3, 3, 32, 64)).astype(jnp.bfloat16);  p["bn2s"] = init_bn(64)
    p["blocks_s"] = [init_block(pg, *s) for s in _BLOCK_SPECS]
    p["conv3s"] = init_sep(pg, 1024, 1536); p["bn3s"] = init_bn(1536)
    p["conv4s"] = init_sep(pg, 1536, 2048); p["bn4s"] = init_bn(2048)
    # fusion modules
    p["pag1"] = init_pag(pg, 728, 364)
    p["pag2"] = init_pag(pg, 728, 364)
    p["get_high1"] = high_pass_kernel(3, 1.0, 32)
    p["get_high2"] = high_pass_kernel(3, 1.0, 64)
    # TODO(synk): the source classifier() uses self.last_linear which is never defined
    # in __init__; we synthesize a deterministic 2048 -> num_classes linear head.
    p["last_linear_w"] = pg.normal((2048, num_classes)).astype(jnp.bfloat16)
    p["last_linear_b"] = jnp.zeros((num_classes,), jnp.float32)
    return p


# ----------------------------------------------------------------------------
# Forward pass (mirrors Xception.fea_part1..5 / features / classifier)
# ----------------------------------------------------------------------------
def fea_part1(p, x, y):
    x = conv3x3_bn(x, p["conv1_w"], p["bn1"], stride=2, relu=True)
    y = conv3x3_bn(y, p["conv1s_w"], p["bn1s"], stride=2, relu=True)
    y = depthwise3x3(x, p["get_high1"], add=y)               # y + get_high1(x) fused
    x = conv3x3_bn(x, p["conv2_w"], p["bn2"], relu=True)
    y = conv3x3_bn(y, p["conv2s_w"], p["bn2s"], relu=True)
    y = depthwise3x3(x, p["get_high2"], add=y)               # y + get_high2(x) fused
    return x, y


def fea_part2(p, x, y):
    for i in range(0, 3):
        x = block_forward(x, p["blocks"][i])
    for i in range(0, 3):
        y = block_forward(y, p["blocks_s"][i])
    x = pag_fm_residual(x, y, p["pag1"])                     # x = x + pag1(x, y)
    return x, y


def fea_part3(p, x, y):
    for i in range(3, 7):
        x = block_forward(x, p["blocks"][i])
    for i in range(3, 7):
        y = block_forward(y, p["blocks_s"][i])
    return x, y


def fea_part4(p, x, y):
    for i in range(7, 11):
        x = block_forward(x, p["blocks"][i])
    for i in range(7, 11):
        y = block_forward(y, p["blocks_s"][i])
    x = pag_fm_residual(x, y, p["pag2"])                     # x = x + pag2(x, y)
    x = block_forward(x, p["blocks"][11])
    y = block_forward(y, p["blocks_s"][11])
    return x, y


def fea_part5(p, x, y):
    x = sepconv_bn(x, p["conv3"], p["bn3"], relu=True)
    x = sepconv_bn(x, p["conv4"], p["bn4"])
    y = sepconv_bn(y, p["conv3s"], p["bn3s"], relu=True)
    y = sepconv_bn(y, p["conv4s"], p["bn4s"])
    return x, y


def xception_features(p, x, y):
    x, y = fea_part1(p, x, y)
    x, y = fea_part2(p, x, y)
    x, y = fea_part3(p, x, y)
    x, y = fea_part4(p, x, y)
    x, y = fea_part5(p, x, y)
    return pallas_add(x, y, out_dtype=jnp.float32)           # x = x + y

def xception_classifier(p, feat):
    N, H, W, C = feat.shape
    pooled = pl.pallas_call(
        _relu_mean_kernel,
        out_shape=jax.ShapeDtypeStruct((N, C), jnp.float32),
    )(feat.reshape(N, H * W, C))
    logits_p, _, _, Mp = matmul_bn_stats(pooled, p["last_linear_w"],
                                         out_dtype=jnp.float32)
    return logits_p[:N] + p["last_linear_b"]


def xception_forward(p, x_nchw, y_nchw):
    # TODO(synk): source forward() calls self.features(input) with a single argument
    # although features() requires (x, y); we expose the two-stream forward explicitly.
    x = jnp.transpose(x_nchw, (0, 2, 3, 1)).astype(jnp.bfloat16)
    y = jnp.transpose(y_nchw, (0, 2, 3, 1)).astype(jnp.bfloat16)
    feat = xception_features(p, x, y)
    out = xception_classifier(p, feat)
    return out, jnp.transpose(feat, (0, 3, 1, 2))            # (logits, features NCHW)


# ----------------------------------------------------------------------------
if __name__ == "__main__":
    key = jax.random.PRNGKey(0)
    kx, ky, kp = jax.random.split(key, 3)
    N, inc, H, W = 2, 3, 32, 32
    num_classes = 2
    x = jax.random.normal(kx, (N, inc, H, W), dtype=jnp.float32)
    y = jax.random.normal(ky, (N, inc, H, W), dtype=jnp.float32)
    params = init_xception_params(kp, inc=inc, num_classes=num_classes)

    out, feat = xception_forward(params, x, y)
    jax.block_until_ready((out, feat))

    assert out.shape == (N, num_classes), out.shape
    assert feat.shape[:2] == (N, 2048), feat.shape
    assert bool(jnp.all(jnp.isfinite(out))) and bool(jnp.all(jnp.isfinite(feat)))
    print("KERNEL_OK")
</pallas_src>

<mosaic_0001>
module attributes {stable_mosaic.version = 11 : i64} {
  func.func @_matmul_stats_kernel(%arg0: i32, %arg1: i32, %arg2: memref<456x27xbf16, #tpu.memory_space<vmem>>, %arg3: memref<27x32xbf16, #tpu.memory_space<vmem>>, %arg4: memref<456x32xbf16, #tpu.memory_space<vmem>>, %arg5: memref<1x1x32xf32, #tpu.memory_space<vmem>>, %arg6: memref<1x1x32xf32, #tpu.memory_space<vmem>>) attributes {dimension_semantics = [#tpu.dimension_semantics<parallel>, #tpu.dimension_semantics<parallel>], iteration_bounds = array<i64: 1, 1>, scalar_prefetch = 0 : i64, scratch_operands = 0 : i64, tpu.core_type = #tpu.core_type<tc>, window_params = [{transform_indices = @transform_0, window_bounds = array<i64: 456, 27>}, {transform_indices = @transform_1, window_bounds = array<i64: 27, 32>}, {transform_indices = @transform_2, window_bounds = array<i64: 456, 32>}, {transform_indices = @transform_3, window_bounds = array<i64: 1, 1, 32>}, {transform_indices = @transform_4, window_bounds = array<i64: 1, 1, 32>}]} {
    %c0 = arith.constant 0 : index
    %c0_0 = arith.constant 0 : index
    %0 = vector.load %arg2[%c0, %c0_0] : memref<456x27xbf16, #tpu.memory_space<vmem>>, vector<456x27xbf16>
    %c0_1 = arith.constant 0 : index
    %c0_2 = arith.constant 0 : index
    %1 = vector.load %arg3[%c0_1, %c0_2] : memref<27x32xbf16, #tpu.memory_space<vmem>>, vector<27x32xbf16>
    %cst = arith.constant dense<0.000000e+00> : vector<456x32xf32>
    %2 = tpu.matmul %0, %1, %cst {dimension_numbers = #tpu.dot_dimension_numbers<[1], [0], [0], [1], [0, 0, 1, 1], [], []>} : vector<456x27xbf16>, vector<27x32xbf16>, vector<456x32xf32> -> vector<456x32xf32>
    %3 = arith.truncf %2 : vector<456x32xf32> to vector<456x32xbf16>
    %c0_3 = arith.constant 0 : index
    %c0_4 = arith.constant 0 : index
    %4 = vector.load %arg4[%c0_3, %c0_4] : memref<456x32xbf16, #tpu.memory_space<vmem>>, vector<456x32xbf16>
    tpu.vector_store %arg4[%c0_3, %c0_4], %3 {strides = array<i32>} : memref<456x32xbf16, #tpu.memory_space<vmem>>, vector<456x32xbf16>,
    %cst_5 = arith.constant dense<0.000000e+00> : vector<32xf32>
    %5 = vector.multi_reduction <add>, %2, %cst_5 [0] : vector<456x32xf32> to vector<32xf32>
    %6 = vector.shape_cast %5 : vector<32xf32> to vector<1x32xf32>
    %c0_6 = arith.constant 0 : index
    %c0_7 = arith.constant 0 : index
    %c0_8 = arith.constant 0 : index
    %7 = vector.load %arg5[%c0_6, %c0_7, %c0_8] : memref<1x1x32xf32, #tpu.memory_space<vmem>>, vector<1x1x32xf32>
    %8 = vector.shape_cast %7 : vector<1x1x32xf32> to vector<1x32xf32>
    %9 = vector.shape_cast %6 : vector<1x32xf32> to vector<1x1x32xf32>
    tpu.vector_store %arg5[%c0_6, %c0_7, %c0_8], %9 {strides = array<i32>} : memref<1x1x32xf32, #tpu.memory_space<vmem>>, vector<1x1x32xf32>,
    %10 = arith.mulf %2, %2 : vector<456x32xf32>
    %cst_9 = arith.constant dense<0.000000e+00> : vector<32xf32>
    %11 = vector.multi_reduction <add>, %10, %cst_9 [0] : vector<456x32xf32> to vector<32xf32>
    %12 = vector.shape_cast %11 : vector<32xf32> to vector<1x32xf32>
    %c0_10 = arith.constant 0 : index
    %c0_11 = arith.constant 0 : index
    %c0_12 = arith.constant 0 : index
    %13 = vector.load %arg6[%c0_10, %c0_11, %c0_12] : memref<1x1x32xf32, #tpu.memory_space<vmem>>, vector<1x1x32xf32>
    %14 = vector.shape_cast %13 : vector<1x1x32xf32> to vector<1x32xf32>
    %15 = vector.shape_cast %12 : vector<1x32xf32> to vector<1x1x32xf32>
    tpu.vector_store %arg6[%c0_10, %c0_11, %c0_12], %15 {strides = array<i32>} : memref<1x1x32xf32, #tpu.memory_space<vmem>>, vector<1x1x32xf32>,
    return
  }
  func.func @transform_0(%arg0: i32, %arg1: i32) -> (i32, i32) {
    %c0_i32 = arith.constant 0 : i32
    %c0_i32_0 = arith.constant 0 : i32
    return %arg0, %c0_i32 : i32, i32
  }
  func.func @transform_1(%arg0: i32, %arg1: i32) -> (i32, i32) {
    %c0_i32 = arith.constant 0 : i32
    %c0_i32_0 = arith.constant 0 : i32
    return %c0_i32, %arg1 : i32, i32
  }
  func.func @transform_2(%arg0: i32, %arg1: i32) -> (i32, i32) {
    %c0_i32 = arith.constant 0 : i32
    return %arg0, %arg1 : i32, i32
  }
  func.func @transform_3(%arg0: i32, %arg1: i32) -> (i32, i32, i32) {
    %c0_i32 = arith.constant 0 : i32
    %c0_i32_0 = arith.constant 0 : i32
    return %arg0, %c0_i32, %arg1 : i32, i32, i32
  }
  func.func @transform_4(%arg0: i32, %arg1: i32) -> (i32, i32, i32) {
    %c0_i32 = arith.constant 0 : i32
    %c0_i32_0 = arith.constant 0 : i32
    return %arg0, %c0_i32, %arg1 : i32, i32, i32
  }
}

</mosaic_0001>

<llo_original>
// kernel: tpu_custom_call.1
$region0: #{tpu_custom_call.1}
  #allocation0 [shape = 'u32[]', space=smem, size = 0x4, offset = 0x4, fixed_abs, tag = 'smem constant byte address 0x4 - core index']
  #allocation1 [shape = 'u32[144,128]{1,0:T(1,128)}', space=vmem, size = 0x12000, scoped, tag = 'internal scratch']
  %s0 = inlined_call_operand.vmem [shape: bf16[456,27], index: 0, kind: input, shape index: {}]
  %s1 = inlined_call_operand.vmem [shape: bf16[27,32], index: 1, kind: input, shape index: {}]
  %s2 = inlined_call_operand.vmem [shape: bf16[456,32], index: 2, kind: output, shape index: {0}]
  %s3 = inlined_call_operand.hbm [shape: f32[1,1,32], index: 3, kind: output, shape index: {1}]
  %s4 = inlined_call_operand.hbm [shape: f32[1,1,32], index: 4, kind: output, shape index: {2}]
  %5 = xla_tuple %s2, %s3, %s4
  %s6 = sld [smem:[#allocation0]]
  $region34: #{tpu_custom_call.1} parent=0
    _
  %s8 = ssub.s32 1, %s6
  %s9 = scalar_select 0, %s8, %s6
  $region1: #{tpu_custom_call.1} parent=0
    #allocation2 [shape = 'u8[512]{0}', space=vmem, size = 0x400, scoped, tag = 'output window, operand 1, single buffered']
    #allocation3 [shape = 's32[1]{0}', space=sflag, size = 0x4, scoped, tag = 'scoped memory for tpu_custom_call.1']
    #allocation4 [shape = 'u8[512]{0}', space=vmem, size = 0x400, scoped, tag = 'output window, operand 2, single buffered']
    #allocation5 [shape = 's32[1]{0}', space=sflag, size = 0x4, scoped, tag = 'scoped memory for tpu_custom_call.1']
    %10 = vsyncpa [#allocation3], 0
    %11 = vsyncpa [#allocation5], 0
    // Predicated region
    $region2: #{tpu_custom_call.1} parent=1 // pred_check
      _
    $region3: #{tpu_custom_call.1} parent=1 // pred_check_branch
      %13 = sbr.rel (0) target = $region5
    $region4: #{tpu_custom_call.1} parent=1 // pred_region
      _
    $region5: #{tpu_custom_call.1} parent=1 // pred_fallthru
      _
    // Predicated region
    $region6: #{tpu_custom_call.1} parent=1 // pred_check
      _
    $region7: #{tpu_custom_call.1} parent=1 // pred_check_branch
      %15 = sbr.rel (0) target = $region9
    $region8: #{tpu_custom_call.1} parent=1 // pred_region
      _
    $region9: #{tpu_custom_call.1} parent=1 // pred_fallthru
      _
    %v17 = vld [vmem:[%s0] sm:$0xf]
    %v18 = vld [vmem:[%s0 + $0x4] sm:$0xf]
    %v19 = vld [vmem:[%s0 + $0x8] sm:$0xf]
    %v20 = vld [vmem:[%s0 + $0xc] sm:$0xf]
    %v21 = vld [vmem:[%s0 + $0x10] sm:$0xf]
    %v22 = vld [vmem:[%s0 + $0x14] sm:$0xf]
    %v23 = vld [vmem:[%s0 + $0x18] sm:$0xf]
    %v24 = vld [vmem:[%s0 + $0x1c] sm:$0xf]
    %v25 = vld [vmem:[%s0 + $0x20] sm:$0xf]
    %v26 = vld [vmem:[%s0 + $0x24] sm:$0xf]
    %v27 = vld [vmem:[%s0 + $0x28] sm:$0xf]
    %v28 = vld [vmem:[%s0 + $0x2c] sm:$0xf]
    %v29 = vld [vmem:[%s0 + $0x30] sm:$0xf]
    %v30 = vld [vmem:[%s0 + $0x34] sm:$0xf]
    %v31 = vld [vmem:[%s0 + $0x38] sm:$0xf]
    %v32 = vld [vmem:[%s0 + $0x3c] sm:$0xf]
    %v33 = vld [vmem:[%s0 + $0x40] sm:$0xf]
    %v34 = vld [vmem:[%s0 + $0x44] sm:$0xf]
    %v35 = vld [vmem:[%s0 + $0x48] sm:$0xf]
    %v36 = vld [vmem:[%s0 + $0x4c] sm:$0xf]
    %v37 = vld [vmem:[%s0 + $0x50] sm:$0xf]
    %v38 = vld [vmem:[%s0 + $0x54] sm:$0xf]
    %v39 = vld [vmem:[%s0 + $0x58] sm:$0xf]
    %v40 = vld [vmem:[%s0 + $0x5c] sm:$0xf]
    %v41 = vld [vmem:[%s0 + $0x60] sm:$0xf]
    %v42 = vld [vmem:[%s0 + $0x64] sm:$0xf]
    %v43 = vld [vmem:[%s0 + $0x68] sm:$0xf]
    %v44 = vld [vmem:[%s0 + $0x6c] sm:$0xf]
    %v45 = vld [vmem:[%s0 + $0x70] sm:$0xf]
    %v46 = vld [vmem:[%s0 + $0x74] sm:$0xf]
    %v47 = vld [vmem:[%s0 + $0x78] sm:$0xf]
    %v48 = vld [vmem:[%s0 + $0x7c] sm:$0xf]
    %v49 = vld [vmem:[%s0 + $0x80] sm:$0xf]
    %v50 = vld [vmem:[%s0 + $0x84] sm:$0xf]
    %v51 = vld [vmem:[%s0 + $0x88] sm:$0xf]
    %v52 = vld [vmem:[%s0 + $0x8c] sm:$0xf]
    %v53 = vld [vmem:[%s0 + $0x90] sm:$0xf]
    %v54 = vld [vmem:[%s0 + $0x94] sm:$0xf]
    %v55 = vld [vmem:[%s0 + $0x98] sm:$0xf]
    %v56 = vld [vmem:[%s0 + $0x9c] sm:$0xf]
    %v57 = vld [vmem:[%s0 + $0xa0] sm:$0xf]
    %v58 = vld [vmem:[%s0 + $0xa4] sm:$0xf]
    %v59 = vld [vmem:[%s0 + $0xa8] sm:$0xf]
    %v60 = vld [vmem:[%s0 + $0xac] sm:$0xf]
    %v61 = vld [vmem:[%s0 + $0xb0] sm:$0xf]
    %v62 = vld [vmem:[%s0 + $0xb4] sm:$0xf]
    %v63 = vld [vmem:[%s0 + $0xb8] sm:$0xf]
    %v64 = vld [vmem:[%s0 + $0xbc] sm:$0xf]
    %v65 = vld [vmem:[%s0 + $0xc0] sm:$0xf]
    %v66 = vld [vmem:[%s0 + $0xc4] sm:$0xf]
    %v67 = vld [vmem:[%s0 + $0xc8] sm:$0xf]
    %v68 = vld [vmem:[%s0 + $0xcc] sm:$0xf]
    %v69 = vld [vmem:[%s0 + $0xd0] sm:$0xf]
    %v70 = vld [vmem:[%s0 + $0xd4] sm:$0xf]
    %v71 = vld [vmem:[%s0 + $0xd8] sm:$0xf]
    %v72 = vld [vmem:[%s0 + $0xdc] sm:$0xf]
    %v73 = vld [vmem:[%s0 + $0xe0] sm:$0xf]
    %v74 = vld [vmem:[%s1] sm:$0xf]
    %v75 = vld [vmem:[%s1 + $0x4] sm:$0xf]
    %v76 = vld [vmem:[%s1 + $0x8] sm:$0xf]
    %v77 = vld [vmem:[%s1 + $0xc] sm:$0x3]
    %v135 = vunpack.c.l.b16 %v17
    %v136 = vunpack.c.l.b16 %v18
    %v137 = vunpack.c.l.b16 %v19
    %v138 = vunpack.c.l.b16 %v20
    %v139 = vunpack.c.l.b16 %v21
    %v140 = vunpack.c.l.b16 %v22
    %v141 = vunpack.c.l.b16 %v23
    %v142 = vunpack.c.l.b16 %v24
    %v143 = vunpack.c.l.b16 %v25
    %v144 = vunpack.c.l.b16 %v26
    %v145 = vunpack.c.l.b16 %v27
    %v146 = vunpack.c.l.b16 %v28
    %v147 = vunpack.c.l.b16 %v29
    %v148 = vunpack.c.l.b16 %v30
    %v149 = vunpack.c.l.b16 %v31
    %v150 = vunpack.c.l.b16 %v32
    %v151 = vunpack.c.l.b16 %v33
    %v152 = vunpack.c.l.b16 %v34
    %v153 = vunpack.c.l.b16 %v35
    %v154 = vunpack.c.l.b16 %v36
    %v155 = vunpack.c.l.b16 %v37
    %v156 = vunpack.c.l.b16 %v38
    %v157 = vunpack.c.l.b16 %v39
    %v158 = vunpack.c.l.b16 %v40
    %v159 = vunpack.c.l.b16 %v41
    %v160 = vunpack.c.l.b16 %v42
    %v161 = vunpack.c.l.b16 %v43
    %v162 = vunpack.c.l.b16 %v44
    %v163 = vunpack.c.l.b16 %v45
    %v164 = vunpack.c.l.b16 %v46
    %v165 = vunpack.c.l.b16 %v47
    %v166 = vunpack.c.l.b16 %v48
    %v167 = vunpack.c.l.b16 %v49
    %v168 = vunpack.c.l.b16 %v50
    %v169 = vunpack.c.l.b16 %v51
    %v170 = vunpack.c.l.b16 %v52
    %v171 = vunpack.c.l.b16 %v53
    %v172 = vunpack.c.l.b16 %v54
    %v173 = vunpack.c.l.b16 %v55
    %v174 = vunpack.c.l.b16 %v56
    %v175 = vunpack.c.l.b16 %v57
    %v176 = vunpack.c.l.b16 %v58
    %v177 = vunpack.c.l.b16 %v59
    %v178 = vunpack.c.l.b16 %v60
    %v179 = vunpack.c.l.b16 %v61
    %v180 = vunpack.c.l.b16 %v62
    %v181 = vunpack.c.l.b16 %v63
    %v182 = vunpack.c.l.b16 %v64
    %v183 = vunpack.c.l.b16 %v65
    %v184 = vunpack.c.l.b16 %v66
    %v185 = vunpack.c.l.b16 %v67
    %v186 = vunpack.c.l.b16 %v68
    %v187 = vunpack.c.l.b16 %v69
    %v188 = vunpack.c.l.b16 %v70
    %v189 = vunpack.c.l.b16 %v71
    %v190 = vunpack.c.l.b16 %v72
    %v191 = vunpack.c.l.b16 %v73
    %v192 = vpack.c.b16 %v136, %v135
    %v193 = vpack.c.b16 %v138, %v137
    %v194 = vpack.c.b16 %v140, %v139
    %v195 = vpack.c.b16 %v142, %v141
    %v196 = vpack.c.b16 %v144, %v143
    %v197 = vpack.c.b16 %v146, %v145
    %v198 = vpack.c.b16 %v148, %v147
    %v199 = vpack.c.b16 %v150, %v149
    %v200 = vpack.c.b16 %v152, %v151
    %v201 = vpack.c.b16 %v154, %v153
    %v202 = vpack.c.b16 %v156, %v155
    %v203 = vpack.c.b16 %v158, %v157
    %v204 = vpack.c.b16 %v160, %v159
    %v205 = vpack.c.b16 %v162, %v161
    %v206 = vpack.c.b16 %v164, %v163
    %v207 = vpack.c.b16 %v166, %v165
    %v208 = vpack.c.b16 %v168, %v167
    %v209 = vpack.c.b16 %v170, %v169
    %v210 = vpack.c.b16 %v172, %v171
    %v211 = vpack.c.b16 %v174, %v173
    %v212 = vpack.c.b16 %v176, %v175
    %v213 = vpack.c.b16 %v178, %v177
    %v214 = vpack.c.b16 %v180, %v179
    %v215 = vpack.c.b16 %v182, %v181
    %v216 = vpack.c.b16 %v184, %v183
    %v217 = vpack.c.b16 %v186, %v185
    %v218 = vpack.c.b16 %v188, %v187
    %v219 = vpack.c.b16 %v190, %v189
    %v220 = vpack.c.b16 %v191, %v191
    %v225 = vunpack.c.l.b16 %v74
    %v226 = vunpack.c.l.b16 %v75
    %v227 = vunpack.c.l.b16 %v76
    %v228 = vunpack.c.l.b16 %v77
    %v229 = vpack.c.b16 %v226, %v225
    %v230 = vpack.c.b16 %v228, %v227
    %vm232 = vcmask 220160
    %v234 = vsel %vm232, %v192, 0
    %v237 = vsel %vm232, %v193, 0
    %v240 = vsel %vm232, %v194, 0
    %v243 = vsel %vm232, %v195, 0
    %v246 = vsel %vm232, %v196, 0
    %v249 = vsel %vm232, %v197, 0
    %v252 = vsel %vm232, %v198, 0
    %v255 = vsel %vm232, %v199, 0
    %v258 = vsel %vm232, %v200, 0
    %v261 = vsel %vm232, %v201, 0
    %v264 = vsel %vm232, %v202, 0
    %v267 = vsel %vm232, %v203, 0
    %v270 = vsel %vm232, %v204, 0
    %v273 = vsel %vm232, %v205, 0
    %v276 = vsel %vm232, %v206, 0
    %v279 = vsel %vm232, %v207, 0
    %v282 = vsel %vm232, %v208, 0
    %v285 = vsel %vm232, %v209, 0
    %v288 = vsel %vm232, %v210, 0
    %v291 = vsel %vm232, %v211, 0
    %v294 = vsel %vm232, %v212, 0
    %v297 = vsel %vm232, %v213, 0
    %v300 = vsel %vm232, %v214, 0
    %v303 = vsel %vm232, %v215, 0
    %v306 = vsel %vm232, %v216, 0
    %v309 = vsel %vm232, %v217, 0
    %v312 = vsel %vm232, %v218, 0
    %v315 = vsel %vm232, %v219, 0
    %v318 = vsel %vm232, %v220, 0
    %vm320 = vcmask 1044480
    %vm321 = vcmask 1045504
    %v322 = vsel %vm320, 4294967295, 65535
    %v323 = vsel %vm321, %v322, 0
    %v325 = vand.u32 %v230, %v323
    %327 = vmatprep.subr.bf16.mxu0 0
    %328 = vmatpush1.bf16.msra.mxu0 %v229
    %329 = vmatprep.subr.bf16.mxu0 0
    %330 = vmatpush1.bf16.msra.mxu0 %v325
    %331 = vmatprep.subr.bf16.mxu0 0
    %332 = vmatpush1.bf16.msra.mxu0 0
    %333 = vmatprep.subr.bf16.mxu0 0
    %334 = vmatpush1.bf16.msra.mxu0 0
    %335 = vmatprep.subr.bf16.mxu0 0
    %336 = vmatpush1.bf16.msra.mxu0 0
    %337 = vmatprep.subr.bf16.mxu0 0
    %338 = vmatpush1.bf16.msra.mxu0 0
    %339 = vmatprep.subr.bf16.mxu0 0
    %340 = vmatpush1.bf16.msra.mxu0 0
    %341 = vmatprep.subr.bf16.mxu0 0
    %342 = vmatpush1.bf16.msra.mxu0 0
    %343 = vmatprep.subr.bf16.mxu0 0
    %344 = vmatpush1.bf16.msra.mxu0 0
    %345 = vmatprep.subr.bf16.mxu0 0
    %346 = vmatpush1.bf16.msra.mxu0 0
    %347 = vmatprep.subr.bf16.mxu0 0
    %348 = vmatpush1.bf16.msra.mxu0 0
    %349 = vmatprep.subr.bf16.mxu0 0
    %350 = vmatpush1.bf16.msra.mxu0 0
    %351 = vmatprep.subr.bf16.mxu0 0
    %352 = vmatpush1.bf16.msra.mxu0 0
    %353 = vmatprep.subr.bf16.mxu0 0
    %354 = vmatpush1.bf16.msra.mxu0 0
    %355 = vmatprep.subr.bf16.mxu0 0
    %356 = vmatpush1.bf16.msra.mxu0 0
    %357 = vmatprep.subr.bf16.mxu0 0
    %358 = vmatpush1.bf16.msra.mxu0 0
    %359 = vmatprep.mubr.bf16.mxu0 0
    %360 = vmatmul.mubr.bf16.gmra.mrb[0].mxu0 %v234
    %v361 = vpop.f32.mrb[0].mxu0
    %v362 = vadd.f32 0.0, %v361
    %v363 = vpop.f32.mrb[0].mxu0
    %v364 = vpop.f32.mrb[0].mxu0
    %v365 = vadd.f32 0.0, %v364
    %v366 = vpop.f32.mrb[0].mxu0
    %367 = vmatprep.mubr.bf16.mxu0 0
    %368 = vmatmul.mubr.bf16.gmra.mrb[0].mxu0 %v237
    %v369 = vpop.f32.mrb[0].mxu0
    %v370 = vadd.f32 0.0, %v369
    %v371 = vpop.f32.mrb[0].mxu0
    %v372 = vpop.f32.mrb[0].mxu0
    %v373 = vadd.f32 0.0, %v372
    %v374 = vpop.f32.mrb[0].mxu0
    %375 = vmatprep.mubr.bf16.mxu0 0
    %376 = vmatmul.mubr.bf16.gmra.mrb[0].mxu0 %v240
    %v377 = vpop.f32.mrb[0].mxu0
    %v378 = vadd.f32 0.0, %v377
    %v379 = vpop.f32.mrb[0].mxu0
    %v380 = vpop.f32.mrb[0].mxu0
    %v381 = vadd.f32 0.0, %v380
    %v382 = vpop.f32.mrb[0].mxu0
    %383 = vmatprep.mubr.bf16.mxu0 0
    %384 = vmatmul.mubr.bf16.gmra.mrb[0].mxu0 %v243
    %v385 = vpop.f32.mrb[0].mxu0
    %v386 = vadd.f32 0.0, %v385
    %v387 = vpop.f32.mrb[0].mxu0
    %v388 = vpop.f32.mrb[0].mxu0
    %v389 = vadd.f32 0.0, %v388
    %v390 = vpop.f32.mrb[0].mxu0
    %391 = vmatprep.mubr.bf16.mxu0 0
    %392 = vmatmul.mubr.bf16.gmra.mrb[0].mxu0 %v246
    %v393 = vpop.f32.mrb[0].mxu0
    %v394 = vadd.f32 0.0, %v393
    %v395 = vpop.f32.mrb[0].mxu0
    %v396 = vpop.f32.mrb[0].mxu0
    %v397 = vadd.f32 0.0, %v396
    %v398 = vpop.f32.mrb[0].mxu0
    %399 = vmatprep.mubr.bf16.mxu0 0
    %400 = vmatmul.mubr.bf16.gmra.mrb[0].mxu0 %v249
    %v401 = vpop.f32.mrb[0].mxu0
    %v402 = vadd.f32 0.0, %v401
    %v403 = vpop.f32.mrb[0].mxu0
    %v404 = vpop.f32.mrb[0].mxu0
    %v405 = vadd.f32 0.0, %v404
    %v406 = vpop.f32.mrb[0].mxu0
    %407 = vmatprep.mubr.bf16.mxu0 0
    %408 = vmatmul.mubr.bf16.gmra.mrb[0].mxu0 %v252
    %v409 = vpop.f32.mrb[0].mxu0
    %v410 = vadd.f32 0.0, %v409
    %v411 = vpop.f32.mrb[0].mxu0
    %v412 = vpop.f32.mrb[0].mxu0
    %v413 = vadd.f32 0.0, %v412
    %v414 = vpop.f32.mrb[0].mxu0
    %415 = vmatprep.mubr.bf16.mxu0 0
    %416 = vmatmul.mubr.bf16.gmra.mrb[0].mxu0 %v255
    %v417 = vpop.f32.mrb[0].mxu0
    %v418 = vadd.f32 0.0, %v417
    %v419 = vpop.f32.mrb[0].mxu0
    %v420 = vpop.f32.mrb[0].mxu0
    %v421 = vadd.f32 0.0, %v420
    %v422 = vpop.f32.mrb[0].mxu0
    %423 = vmatprep.mubr.bf16.mxu0 0
    %424 = vmatmul.mubr.bf16.gmra.mrb[0].mxu0 %v258
    %v425 = vpop.f32.mrb[0].mxu0
    %v426 = vadd.f32 0.0, %v425
    %v427 = vpop.f32.mrb[0].mxu0
    %v428 = vpop.f32.mrb[0].mxu0
    %v429 = vadd.f32 0.0, %v428
    %v430 = vpop.f32.mrb[0].mxu0
    %431 = vmatprep.mubr.bf16.mxu0 0
    %432 = vmatmul.mubr.bf16.gmra.mrb[0].mxu0 %v261
    %v433 = vpop.f32.mrb[0].mxu0
    %v434 = vadd.f32 0.0, %v433
    %v435 = vpop.f32.mrb[0].mxu0
    %v436 = vpop.f32.mrb[0].mxu0
    %v437 = vadd.f32 0.0, %v436
    %v438 = vpop.f32.mrb[0].mxu0
    %439 = vmatprep.mubr.bf16.mxu0 0
    %440 = vmatmul.mubr.bf16.gmra.mrb[0].mxu0 %v264
    %v441 = vpop.f32.mrb[0].mxu0
    %v442 = vadd.f32 0.0, %v441
    %v443 = vpop.f32.mrb[0].mxu0
    %v444 = vpop.f32.mrb[0].mxu0
    %v445 = vadd.f32 0.0, %v444
    %v446 = vpop.f32.mrb[0].mxu0
    %447 = vmatprep.mubr.bf16.mxu0 0
    %448 = vmatmul.mubr.bf16.gmra.mrb[0].mxu0 %v267
    %v449 = vpop.f32.mrb[0].mxu0
    %v450 = vadd.f32 0.0, %v449
    %v451 = vpop.f32.mrb[0].mxu0
    %v452 = vpop.f32.mrb[0].mxu0
    %v453 = vadd.f32 0.0, %v452
    %v454 = vpop.f32.mrb[0].mxu0
    %455 = vmatprep.mubr.bf16.mxu0 0
    %456 = vmatmul.mubr.bf16.gmra.mrb[0].mxu0 %v270
    %v457 = vpop.f32.mrb[0].mxu0
    %v458 = vadd.f32 0.0, %v457
    %v459 = vpop.f32.mrb[0].mxu0
    %v460 = vpop.f32.mrb[0].mxu0
    %v461 = vadd.f32 0.0, %v460
    %v462 = vpop.f32.mrb[0].mxu0
    %463 = vmatprep.mubr.bf16.mxu0 0
    %464 = vmatmul.mubr.bf16.gmra.mrb[0].mxu0 %v273
    %v465 = vpop.f32.mrb[0].mxu0
    %v466 = vadd.f32 0.0, %v465
    %v467 = vpop.f32.mrb[0].mxu0
    %v468 = vpop.f32.mrb[0].mxu0
    %v469 = vadd.f32 0.0, %v468
    %v470 = vpop.f32.mrb[0].mxu0
    %471 = vmatprep.mubr.bf16.mxu0 0
    %472 = vmatmul.mubr.bf16.gmra.mrb[0].mxu0 %v276
    %v473 = vpop.f32.mrb[0].mxu0
    %v474 = vadd.f32 0.0, %v473
    %v475 = vpop.f32.mrb[0].mxu0
    %v476 = vpop.f32.mrb[0].mxu0
    %v477 = vadd.f32 0.0, %v476
    %v478 = vpop.f32.mrb[0].mxu0
    %479 = vmatprep.mubr.bf16.mxu0 0
    %480 = vmatmul.mubr.bf16.gmra.mrb[0].mxu0 %v279
    %v481 = vpop.f32.mrb[0].mxu0
    %v482 = vadd.f32 0.0, %v481
    %v483 = vpop.f32.mrb[0].mxu0
    %v484 = vpop.f32.mrb[0].mxu0
    %v485 = vadd.f32 0.0, %v484
    %v486 = vpop.f32.mrb[0].mxu0
    %487 = vmatprep.mubr.bf16.mxu0 0
    %488 = vmatmul.mubr.bf16.gmra.mrb[0].mxu0 %v282
    %v489 = vpop.f32.mrb[0].mxu0
    %v490 = vadd.f32 0.0, %v489
    %v491 = vpop.f32.mrb[0].mxu0
    %v492 = vpop.f32.mrb[0].mxu0
    %v493 = vadd.f32 0.0, %v492
    %v494 = vpop.f32.mrb[0].mxu0
    %495 = vmatprep.mubr.bf16.mxu0 0
    %496 = vmatmul.mubr.bf16.gmra.mrb[0].mxu0 %v285
    %v497 = vpop.f32.mrb[0].mxu0
    %v498 = vadd.f32 0.0, %v497
    %v499 = vpop.f32.mrb[0].mxu0
    %v500 = vpop.f32.mrb[0].mxu0
    %v501 = vadd.f32 0.0, %v500
    %v502 = vpop.f32.mrb[0].mxu0
    %503 = vmatprep.mubr.bf16.mxu0 0
    %504 = vmatmul.mubr.bf16.gmra.mrb[0].mxu0 %v288
    %v505 = vpop.f32.mrb[0].mxu0
    %v506 = vadd.f32 0.0, %v505
    %v507 = vpop.f32.mrb[0].mxu0
    %v508 = vpop.f32.mrb[0].mxu0
    %v509 = vadd.f32 0.0, %v508
    %v510 = vpop.f32.mrb[0].mxu0
    %511 = vmatprep.mubr.bf16.mxu0 0
    %512 = vmatmul.mubr.bf16.gmra.mrb[0].mxu0 %v291
    %v513 = vpop.f32.mrb[0].mxu0
    %v514 = vadd.f32 0.0, %v513
    %v515 = vpop.f32.mrb[0].mxu0
    %v516 = vpop.f32.mrb[0].mxu0
    %v517 = vadd.f32 0.0, %v516
    %v518 = vpop.f32.mrb[0].mxu0
    %519 = vmatprep.mubr.bf16.mxu0 0
    %520 = vmatmul.mubr.bf16.gmra.mrb[0].mxu0 %v294
    %v521 = vpop.f32.mrb[0].mxu0
    %v522 = vadd.f32 0.0, %v521
    %v523 = vpop.f32.mrb[0].mxu0
    %v524 = vpop.f32.mrb[0].mxu0
    %v525 = vadd.f32 0.0, %v524
    %v526 = vpop.f32.mrb[0].mxu0
    %527 = vmatprep.mubr.bf16.mxu0 0
    %528 = vmatmul.mubr.bf16.gmra.mrb[0].mxu0 %v297
    %v529 = vpop.f32.mrb[0].mxu0
    %v530 = vadd.f32 0.0, %v529
    %v531 = vpop.f32.mrb[0].mxu0
    %v532 = vpop.f32.mrb[0].mxu0
    %v533 = vadd.f32 0.0, %v532
    %v534 = vpop.f32.mrb[0].mxu0
    %535 = vmatprep.mubr.bf16.mxu0 0
    %536 = vmatmul.mubr.bf16.gmra.mrb[0].mxu0 %v300
    %v537 = vpop.f32.mrb[0].mxu0
    %v538 = vadd.f32 0.0, %v537
    %v539 = vpop.f32.mrb[0].mxu0
    %v540 = vpop.f32.mrb[0].mxu0
    %v541 = vadd.f32 0.0, %v540
    %v542 = vpop.f32.mrb[0].mxu0
    %543 = vmatprep.mubr.bf16.mxu0 0
    %544 = vmatmul.mubr.bf16.gmra.mrb[0].mxu0 %v303
    %v545 = vpop.f32.mrb[0].mxu0
    %v546 = vadd.f32 0.0, %v545
    %v547 = vpop.f32.mrb[0].mxu0
    %v548 = vpop.f32.mrb[0].mxu0
    %v549 = vadd.f32 0.0, %v548
    %v550 = vpop.f32.mrb[0].mxu0
    %551 = vmatprep.mubr.bf16.mxu0 0
    %552 = vmatmul.mubr.bf16.gmra.mrb[0].mxu0 %v306
    %v553 = vpop.f32.mrb[0].mxu0
    %v554 = vadd.f32 0.0, %v553
    %v555 = vpop.f32.mrb[0].mxu0
    %v556 = vpop.f32.mrb[0].mxu0
    %v557 = vadd.f32 0.0, %v556
    %v558 = vpop.f32.mrb[0].mxu0
    %559 = vmatprep.mubr.bf16.mxu0 0
    %560 = vmatmul.mubr.bf16.gmra.mrb[0].mxu0 %v309
    %v561 = vpop.f32.mrb[0].mxu0
    %v562 = vadd.f32 0.0, %v561
    %v563 = vpop.f32.mrb[0].mxu0
    %v564 = vpop.f32.mrb[0].mxu0
    %v565 = vadd.f32 0.0, %v564
    %v566 = vpop.f32.mrb[0].mxu0
    %567 = vmatprep.mubr.bf16.mxu0 0
    %568 = vmatmul.mubr.bf16.gmra.mrb[0].mxu0 %v312
    %v569 = vpop.f32.mrb[0].mxu0
    %v570 = vadd.f32 0.0, %v569
    %v571 = vpop.f32.mrb[0].mxu0
    %v572 = vpop.f32.mrb[0].mxu0
    %v573 = vadd.f32 0.0, %v572
    %v574 = vpop.f32.mrb[0].mxu0
    %575 = vmatprep.mubr.bf16.mxu0 0
    %576 = vmatmul.mubr.bf16.gmra.mrb[0].mxu0 %v315
    %v577 = vpop.f32.mrb[0].mxu0
    %v578 = vadd.f32 0.0, %v577
    %v579 = vpop.f32.mrb[0].mxu0
    %v580 = vpop.f32.mrb[0].mxu0
    %v581 = vadd.f32 0.0, %v580
    %v582 = vpop.f32.mrb[0].mxu0
    %583 = vmatprep.mubr.bf16.mxu0 0
    %584 = vmatmul.mubr.bf16.gmra.mrb[0].mxu0 %v318
    %v585 = vpop.f32.mrb[0].mxu0
    %v586 = vadd.f32 0.0, %v585
    %v587 = vpop.f32.mrb[0].mxu0
    %v588 = vpop.f32.mrb[0].mxu0
    %v589 = vpop.f32.mrb[0].mxu0
    %590 = vdwg.mxu0
    %v591 = vpack.c.bf16 %v365, %v362
    %v592 = vpack.c.bf16 %v373, %v370
    %v593 = vpack.c.bf16 %v381, %v378
    %v594 = vpack.c.bf16 %v389, %v386
    %v595 = vpack.c.bf16 %v397, %v394
    %v596 = vpack.c.bf16 %v405, %v402
    %v597 = vpack.c.bf16 %v413, %v410
    %v598 = vpack.c.bf16 %v421, %v418
    %v599 = vpack.c.bf16 %v429, %v426
    %v600 = vpack.c.bf16 %v437, %v434
    %v601 = vpack.c.bf16 %v445, %v442
    %v602 = vpack.c.bf16 %v453, %v450
    %v603 = vpack.c.bf16 %v461, %v458
    %v604 = vpack.c.bf16 %v469, %v466
    %v605 = vpack.c.bf16 %v477, %v474
    %v606 = vpack.c.bf16 %v485, %v482
    %v607 = vpack.c.bf16 %v493, %v490
    %v608 = vpack.c.bf16 %v501, %v498
    %v609 = vpack.c.bf16 %v509, %v506
    %v610 = vpack.c.bf16 %v517, %v514
    %v611 = vpack.c.bf16 %v525, %v522
    %v612 = vpack.c.bf16 %v533, %v530
    %v613 = vpack.c.bf16 %v541, %v538
    %v614 = vpack.c.bf16 %v549, %v546
    %v615 = vpack.c.bf16 %v557, %v554
    %v616 = vpack.c.bf16 %v565, %v562
    %v617 = vpack.c.bf16 %v573, %v570
    %v618 = vpack.c.bf16 %v581, %v578
    %v619 = vpack.c.bf16 %v586, %v586
    %v649 = vunpack.c.l.b16 %v591
    %v650 = vunpack.c.h.b16 %v591
    %v651 = vunpack.c.l.b16 %v592
    %v652 = vunpack.c.h.b16 %v592
    %v653 = vunpack.c.l.b16 %v593
    %v654 = vunpack.c.h.b16 %v593
    %v655 = vunpack.c.l.b16 %v594
    %v656 = vunpack.c.h.b16 %v594
    %v657 = vunpack.c.l.b16 %v595
    %v658 = vunpack.c.h.b16 %v595
    %v659 = vunpack.c.l.b16 %v596
    %v660 = vunpack.c.h.b16 %v596
    %v661 = vunpack.c.l.b16 %v597
    %v662 = vunpack.c.h.b16 %v597
    %v663 = vunpack.c.l.b16 %v598
    %v664 = vunpack.c.h.b16 %v598
    %v665 = vunpack.c.l.b16 %v599
    %v666 = vunpack.c.h.b16 %v599
    %v667 = vunpack.c.l.b16 %v600
    %v668 = vunpack.c.h.b16 %v600
    %v669 = vunpack.c.l.b16 %v601
    %v670 = vunpack.c.h.b16 %v601
    %v671 = vunpack.c.l.b16 %v602
    %v672 = vunpack.c.h.b16 %v602
    %v673 = vunpack.c.l.b16 %v603
    %v674 = vunpack.c.h.b16 %v603
    %v675 = vunpack.c.l.b16 %v604
    %v676 = vunpack.c.h.b16 %v604
    %v677 = vunpack.c.l.b16 %v605
    %v678 = vunpack.c.h.b16 %v605
    %v679 = vunpack.c.l.b16 %v606
    %v680 = vunpack.c.h.b16 %v606
    %v681 = vunpack.c.l.b16 %v607
    %v682 = vunpack.c.h.b16 %v607
    %v683 = vunpack.c.l.b16 %v608
    %v684 = vunpack.c.h.b16 %v608
    %v685 = vunpack.c.l.b16 %v609
    %v686 = vunpack.c.h.b16 %v609
    %v687 = vunpack.c.l.b16 %v610
    %v688 = vunpack.c.h.b16 %v610
    %v689 = vunpack.c.l.b16 %v611
    %v690 = vunpack.c.h.b16 %v611
    %v691 = vunpack.c.l.b16 %v612
    %v692 = vunpack.c.h.b16 %v612
    %v693 = vunpack.c.l.b16 %v613
    %v694 = vunpack.c.h.b16 %v613
    %v695 = vunpack.c.l.b16 %v614
    %v696 = vunpack.c.h.b16 %v614
    %v697 = vunpack.c.l.b16 %v615
    %v698 = vunpack.c.h.b16 %v615
    %v699 = vunpack.c.l.b16 %v616
    %v700 = vunpack.c.h.b16 %v616
    %v701 = vunpack.c.l.b16 %v617
    %v702 = vunpack.c.h.b16 %v617
    %v703 = vunpack.c.l.b16 %v618
    %v704 = vunpack.c.h.b16 %v618
    %v705 = vunpack.c.l.b16 %v619
    %v706 = vpack.c.b16 %v649, %v649
    %v707 = vpack.c.b16 %v650, %v650
    %v708 = vpack.c.b16 %v651, %v651
    %v709 = vpack.c.b16 %v652, %v652
    %v710 = vpack.c.b16 %v653, %v653
    %v711 = vpack.c.b16 %v654, %v654
    %v712 = vpack.c.b16 %v655, %v655
    %v713 = vpack.c.b16 %v656, %v656
    %v714 = vpack.c.b16 %v657, %v657
    %v715 = vpack.c.b16 %v658, %v658
    %v716 = vpack.c.b16 %v659, %v659
    %v717 = vpack.c.b16 %v660, %v660
    %v718 = vpack.c.b16 %v661, %v661
    %v719 = vpack.c.b16 %v662, %v662
    %v720 = vpack.c.b16 %v663, %v663
    %v721 = vpack.c.b16 %v664, %v664
    %v722 = vpack.c.b16 %v665, %v665
    %v723 = vpack.c.b16 %v666, %v666
    %v724 = vpack.c.b16 %v667, %v667
    %v725 = vpack.c.b16 %v668, %v668
    %v726 = vpack.c.b16 %v669, %v669
    %v727 = vpack.c.b16 %v670, %v670
    %v728 = vpack.c.b16 %v671, %v671
    %v729 = vpack.c.b16 %v672, %v672
    %v730 = vpack.c.b16 %v673, %v673
    %v731 = vpack.c.b16 %v674, %v674
    %v732 = vpack.c.b16 %v675, %v675
    %v733 = vpack.c.b16 %v676, %v676
    %v734 = vpack.c.b16 %v677, %v677
    %v735 = vpack.c.b16 %v678, %v678
    %v736 = vpack.c.b16 %v679, %v679
    %v737 = vpack.c.b16 %v680, %v680
    %v738 = vpack.c.b16 %v681, %v681
    %v739 = vpack.c.b16 %v682, %v682
    %v740 = vpack.c.b16 %v683, %v683
    %v741 = vpack.c.b16 %v684, %v684
    %v742 = vpack.c.b16 %v685, %v685
    %v743 = vpack.c.b16 %v686, %v686
    %v744 = vpack.c.b16 %v687, %v687
    %v745 = vpack.c.b16 %v688, %v688
    %v746 = vpack.c.b16 %v689, %v689
    %v747 = vpack.c.b16 %v690, %v690
    %v748 = vpack.c.b16 %v691, %v691
    %v749 = vpack.c.b16 %v692, %v692
    %v750 = vpack.c.b16 %v693, %v693
    %v751 = vpack.c.b16 %v694, %v694
    %v752 = vpack.c.b16 %v695, %v695
    %v753 = vpack.c.b16 %v696, %v696
    %v754 = vpack.c.b16 %v697, %v697
    %v755 = vpack.c.b16 %v698, %v698
    %v756 = vpack.c.b16 %v699, %v699
    %v757 = vpack.c.b16 %v700, %v700
    %v758 = vpack.c.b16 %v701, %v701
    %v759 = vpack.c.b16 %v702, %v702
    %v760 = vpack.c.b16 %v703, %v703
    %v761 = vpack.c.b16 %v704, %v704
    %v762 = vpack.c.b16 %v705, %v705
    %vm820 = vcmask 257024
    %821 = vst.msk [vmem:[%s2] sm:$0xf] %vm820, %v706
    %822 = vst.msk [vmem:[%s2 + $0x4] sm:$0xf] %vm820, %v707
    %823 = vst.msk [vmem:[%s2 + $0x8] sm:$0xf] %vm820, %v708
    %824 = vst.msk [vmem:[%s2 + $0xc] sm:$0xf] %vm820, %v709
    %825 = vst.msk [vmem:[%s2 + $0x10] sm:$0xf] %vm820, %v710
    %826 = vst.msk [vmem:[%s2 + $0x14] sm:$0xf] %vm820, %v711
    %827 = vst.msk [vmem:[%s2 + $0x18] sm:$0xf] %vm820, %v712
    %828 = vst.msk [vmem:[%s2 + $0x1c] sm:$0xf] %vm820, %v713
    %829 = vst.msk [vmem:[%s2 + $0x20] sm:$0xf] %vm820, %v714
    %830 = vst.msk [vmem:[%s2 + $0x24] sm:$0xf] %vm820, %v715
    %831 = vst.msk [vmem:[%s2 + $0x28] sm:$0xf] %vm820, %v716
    %832 = vst.msk [vmem:[%s2 + $0x2c] sm:$0xf] %vm820, %v717
    %833 = vst.msk [vmem:[%s2 + $0x30] sm:$0xf] %vm820, %v718
    %834 = vst.msk [vmem:[%s2 + $0x34] sm:$0xf] %vm820, %v719
    %835 = vst.msk [vmem:[%s2 + $0x38] sm:$0xf] %vm820, %v720
    %836 = vst.msk [vmem:[%s2 + $0x3c] sm:$0xf] %vm820, %v721
    %837 = vst.msk [vmem:[%s2 + $0x40] sm:$0xf] %vm820, %v722
    %838 = vst.msk [vmem:[%s2 + $0x44] sm:$0xf] %vm820, %v723
    %839 = vst.msk [vmem:[%s2 + $0x48] sm:$0xf] %vm820, %v724
    %840 = vst.msk [vmem:[%s2 + $0x4c] sm:$0xf] %vm820, %v725
    %841 = vst.msk [vmem:[%s2 + $0x50] sm:$0xf] %vm820, %v726
    %842 = vst.msk [vmem:[%s2 + $0x54] sm:$0xf] %vm820, %v727
    %843 = vst.msk [vmem:[%s2 + $0x58] sm:$0xf] %vm820, %v728
    %844 = vst.msk [vmem:[%s2 + $0x5c] sm:$0xf] %vm820, %v729
    %845 = vst.msk [vmem:[%s2 + $0x60] sm:$0xf] %vm820, %v730
    %846 = vst.msk [vmem:[%s2 + $0x64] sm:$0xf] %vm820, %v731
    %847 = vst.msk [vmem:[%s2 + $0x68] sm:$0xf] %vm820, %v732
    %848 = vst.msk [vmem:[%s2 + $0x6c] sm:$0xf] %vm820, %v733
    %849 = vst.msk [vmem:[%s2 + $0x70] sm:$0xf] %vm820, %v734
    %850 = vst.msk [vmem:[%s2 + $0x74] sm:$0xf] %vm820, %v735
    %851 = vst.msk [vmem:[%s2 + $0x78] sm:$0xf] %vm820, %v736
    %852 = vst.msk [vmem:[%s2 + $0x7c] sm:$0xf] %vm820, %v737
    %853 = vst.msk [vmem:[%s2 + $0x80] sm:$0xf] %vm820, %v738
    %854 = vst.msk [vmem:[%s2 + $0x84] sm:$0xf] %vm820, %v739
    %855 = vst.msk [vmem:[%s2 + $0x88] sm:$0xf] %vm820, %v740
    %856 = vst.msk [vmem:[%s2 + $0x8c] sm:$0xf] %vm820, %v741
    %857 = vst.msk [vmem:[%s2 + $0x90] sm:$0xf] %vm820, %v742
    %858 = vst.msk [vmem:[%s2 + $0x94] sm:$0xf] %vm820, %v743
    %859 = vst.msk [vmem:[%s2 + $0x98] sm:$0xf] %vm820, %v744
    %860 = vst.msk [vmem:[%s2 + $0x9c] sm:$0xf] %vm820, %v745
    %861 = vst.msk [vmem:[%s2 + $0xa0] sm:$0xf] %vm820, %v746
    %862 = vst.msk [vmem:[%s2 + $0xa4] sm:$0xf] %vm820, %v747
    %863 = vst.msk [vmem:[%s2 + $0xa8] sm:$0xf] %vm820, %v748
    %864 = vst.msk [vmem:[%s2 + $0xac] sm:$0xf] %vm820, %v749
    %865 = vst.msk [vmem:[%s2 + $0xb0] sm:$0xf] %vm820, %v750
    %866 = vst.msk [vmem:[%s2 + $0xb4] sm:$0xf] %vm820, %v751
    %867 = vst.msk [vmem:[%s2 + $0xb8] sm:$0xf] %vm820, %v752
    %868 = vst.msk [vmem:[%s2 + $0xbc] sm:$0xf] %vm820, %v753
    %869 = vst.msk [vmem:[%s2 + $0xc0] sm:$0xf] %vm820, %v754
    %870 = vst.msk [vmem:[%s2 + $0xc4] sm:$0xf] %vm820, %v755
    %871 = vst.msk [vmem:[%s2 + $0xc8] sm:$0xf] %vm820, %v756
    %872 = vst.msk [vmem:[%s2 + $0xcc] sm:$0xf] %vm820, %v757
    %873 = vst.msk [vmem:[%s2 + $0xd0] sm:$0xf] %vm820, %v758
    %874 = vst.msk [vmem:[%s2 + $0xd4] sm:$0xf] %vm820, %v759
    %875 = vst.msk [vmem:[%s2 + $0xd8] sm:$0xf] %vm820, %v760
    %876 = vst.msk [vmem:[%s2 + $0xdc] sm:$0xf] %vm820, %v761
    %877 = vst.msk [vmem:[%s2 + $0xe0] sm:$0xf] %vm820, %v762
    %vm878 = vcmask 261120
    %v879 = vsel %vm878, %v362, 0.0
    %v880 = vsel %vm878, %v365, 0.0
    %v881 = vadd.f32 %v879, %v880
    %v882 = vsel %vm878, %v370, 0.0
    %v883 = vadd.f32 %v881, %v882
    %v884 = vsel %vm878, %v373, 0.0
    %v885 = vadd.f32 %v883, %v884
    %v886 = vsel %vm878, %v378, 0.0
    %v887 = vadd.f32 %v885, %v886
    %v888 = vsel %vm878, %v381, 0.0
    %v889 = vadd.f32 %v887, %v888
    %v890 = vsel %vm878, %v386, 0.0
    %v891 = vadd.f32 %v889, %v890
    %v892 = vsel %vm878, %v389, 0.0
    %v893 = vadd.f32 %v891, %v892
    %v894 = vsel %vm878, %v394, 0.0
    %v895 = vadd.f32 %v893, %v894
    %v896 = vsel %vm878, %v397, 0.0
    %v897 = vadd.f32 %v895, %v896
    %v898 = vsel %vm878, %v402, 0.0
    %v899 = vadd.f32 %v897, %v898
    %v900 = vsel %vm878, %v405, 0.0
    %v901 = vadd.f32 %v899, %v900
    %v902 = vsel %vm878, %v410, 0.0
    %v903 = vadd.f32 %v901, %v902
    %v904 = vsel %vm878, %v413, 0.0
    %v905 = vadd.f32 %v903, %v904
    %v906 = vsel %vm878, %v418, 0.0
    %v907 = vadd.f32 %v905, %v906
    %v908 = vsel %vm878, %v421, 0.0
    %v909 = vadd.f32 %v907, %v908
    %v910 = vsel %vm878, %v426, 0.0
    %v911 = vadd.f32 %v909, %v910
    %v912 = vsel %vm878, %v429, 0.0
    %v913 = vadd.f32 %v911, %v912
    %v914 = vsel %vm878, %v434, 0.0
    %v915 = vadd.f32 %v913, %v914
    %v916 = vsel %vm878, %v437, 0.0
    %v917 = vadd.f32 %v915, %v916
    %v918 = vsel %vm878, %v442, 0.0
    %v919 = vadd.f32 %v917, %v918
    %v920 = vsel %vm878, %v445, 0.0
    %v921 = vadd.f32 %v919, %v920
    %v922 = vsel %vm878, %v450, 0.0
    %v923 = vadd.f32 %v921, %v922
    %v924 = vsel %vm878, %v453, 0.0
    %v925 = vadd.f32 %v923, %v924
    %v926 = vsel %vm878, %v458, 0.0
    %v927 = vadd.f32 %v925, %v926
    %v928 = vsel %vm878, %v461, 0.0
    %v929 = vadd.f32 %v927, %v928
    %v930 = vsel %vm878, %v466, 0.0
    %v931 = vadd.f32 %v929, %v930
    %v932 = vsel %vm878, %v469, 0.0
    %v933 = vadd.f32 %v931, %v932
    %v934 = vsel %vm878, %v474, 0.0
    %v935 = vadd.f32 %v933, %v934
    %v936 = vsel %vm878, %v477, 0.0
    %v937 = vadd.f32 %v935, %v936
    %v938 = vsel %vm878, %v482, 0.0
    %v939 = vadd.f32 %v937, %v938
    %v940 = vsel %vm878, %v485, 0.0
    %v941 = vadd.f32 %v939, %v940
    %v942 = vsel %vm878, %v490, 0.0
    %v943 = vadd.f32 %v941, %v942
    %v944 = vsel %vm878, %v493, 0.0
    %v945 = vadd.f32 %v943, %v944
    %v946 = vsel %vm878, %v498, 0.0
    %v947 = vadd.f32 %v945, %v946
    %v948 = vsel %vm878, %v501, 0.0
    %v949 = vadd.f32 %v947, %v948
    %v950 = vsel %vm878, %v506, 0.0
    %v951 = vadd.f32 %v949, %v950
    %v952 = vsel %vm878, %v509, 0.0
    %v953 = vadd.f32 %v951, %v952
    %v954 = vsel %vm878, %v514, 0.0
    %v955 = vadd.f32 %v953, %v954
    %v956 = vsel %vm878, %v517, 0.0
    %v957 = vadd.f32 %v955, %v956
    %v958 = vsel %vm878, %v522, 0.0
    %v959 = vadd.f32 %v957, %v958
    %v960 = vsel %vm878, %v525, 0.0
    %v961 = vadd.f32 %v959, %v960
    %v962 = vsel %vm878, %v530, 0.0
    %v963 = vadd.f32 %v961, %v962
    %v964 = vsel %vm878, %v533, 0.0
    %v965 = vadd.f32 %v963, %v964
    %v966 = vsel %vm878, %v538, 0.0
    %v967 = vadd.f32 %v965, %v966
    %v968 = vsel %vm878, %v541, 0.0
    %v969 = vadd.f32 %v967, %v968
    %v970 = vsel %vm878, %v546, 0.0
    %v971 = vadd.f32 %v969, %v970
    %v972 = vsel %vm878, %v549, 0.0
    %v973 = vadd.f32 %v971, %v972
    %v974 = vsel %vm878, %v554, 0.0
    %v975 = vadd.f32 %v973, %v974
    %v976 = vsel %vm878, %v557, 0.0
    %v977 = vadd.f32 %v975, %v976
    %v978 = vsel %vm878, %v562, 0.0
    %v979 = vadd.f32 %v977, %v978
    %v980 = vsel %vm878, %v565, 0.0
    %v981 = vadd.f32 %v979, %v980
    %v982 = vsel %vm878, %v570, 0.0
    %v983 = vadd.f32 %v981, %v982
    %v984 = vsel %vm878, %v573, 0.0
    %v985 = vadd.f32 %v983, %v984
    %v986 = vsel %vm878, %v578, 0.0
    %v987 = vadd.f32 %v985, %v986
    %v988 = vsel %vm878, %v581, 0.0
    %v989 = vadd.f32 %v987, %v988
    %v990 = vsel %vm878, %v586, 0.0
    %v991 = vadd.f32 %v989, %v990
    %v992 = vrot.slane %v991, 4
    %v993 = vadd.f32 %v991, %v992
    %v994 = vrot.slane %v993, 2
    %v995 = vadd.f32 %v993, %v994
    %v996 = vrot.slane %v995, 1
    %v997 = vadd.f32 %v995, %v996
    %vm998 = vcmask 253952
    %999 = vst.msk [vmem:[#allocation2] sm:$0x1] %vm998, %v997
    %v1000 = vmul.f32 %v362, %v362
    %v1001 = vmul.f32 %v365, %v365
    %v1002 = vmul.f32 %v370, %v370
    %v1003 = vmul.f32 %v373, %v373
    %v1004 = vmul.f32 %v378, %v378
    %v1005 = vmul.f32 %v381, %v381
    %v1006 = vmul.f32 %v386, %v386
    %v1007 = vmul.f32 %v389, %v389
    %v1008 = vmul.f32 %v394, %v394
    %v1009 = vmul.f32 %v397, %v397
    %v1010 = vmul.f32 %v402, %v402
    %v1011 = vmul.f32 %v405, %v405
    %v1012 = vmul.f32 %v410, %v410
    %v1013 = vmul.f32 %v413, %v413
    %v1014 = vmul.f32 %v418, %v418
    %v1015 = vmul.f32 %v421, %v421
    %v1016 = vmul.f32 %v426, %v426
    %v1017 = vmul.f32 %v429, %v429
    %v1018 = vmul.f32 %v434, %v434
    %v1019 = vmul.f32 %v437, %v437
    %v1020 = vmul.f32 %v442, %v442
    %v1021 = vmul.f32 %v445, %v445
    %v1022 = vmul.f32 %v450, %v450
    %v1023 = vmul.f32 %v453, %v453
    %v1024 = vmul.f32 %v458, %v458
    %v1025 = vmul.f32 %v461, %v461
    %v1026 = vmul.f32 %v466, %v466
    %v1027 = vmul.f32 %v469, %v469
    %v1028 = vmul.f32 %v474, %v474
    %v1029 = vmul.f32 %v477, %v477
    %v1030 = vmul.f32 %v482, %v482
    %v1031 = vmul.f32 %v485, %v485
    %v1032 = vmul.f32 %v490, %v490
    %v1033 = vmul.f32 %v493, %v493
    %v1034 = vmul.f32 %v498, %v498
    %v1035 = vmul.f32 %v501, %v501
    %v1036 = vmul.f32 %v506, %v506
    %v1037 = vmul.f32 %v509, %v509
    %v1038 = vmul.f32 %v514, %v514
    %v1039 = vmul.f32 %v517, %v517
    %v1040 = vmul.f32 %v522, %v522
    %v1041 = vmul.f32 %v525, %v525
    %v1042 = vmul.f32 %v530, %v530
    %v1043 = vmul.f32 %v533, %v533
    %v1044 = vmul.f32 %v538, %v538
    %v1045 = vmul.f32 %v541, %v541
    %v1046 = vmul.f32 %v546, %v546
    %v1047 = vmul.f32 %v549, %v549
    %v1048 = vmul.f32 %v554, %v554
    %v1049 = vmul.f32 %v557, %v557
    %v1050 = vmul.f32 %v562, %v562
    %v1051 = vmul.f32 %v565, %v565
    %v1052 = vmul.f32 %v570, %v570
    %v1053 = vmul.f32 %v573, %v573
    %v1054 = vmul.f32 %v578, %v578
    %v1055 = vmul.f32 %v581, %v581
    %v1056 = vmul.f32 %v586, %v586
    %v1057 = vsel %vm878, %v1000, 0.0
    %v1058 = vsel %vm878, %v1001, 0.0
    %v1059 = vadd.f32 %v1057, %v1058
    %v1060 = vsel %vm878, %v1002, 0.0
    %v1061 = vadd.f32 %v1059, %v1060
    %v1062 = vsel %vm878, %v1003, 0.0
    %v1063 = vadd.f32 %v1061, %v1062
    %v1064 = vsel %vm878, %v1004, 0.0
    %v1065 = vadd.f32 %v1063, %v1064
    %v1066 = vsel %vm878, %v1005, 0.0
    %v1067 = vadd.f32 %v1065, %v1066
    %v1068 = vsel %vm878, %v1006, 0.0
    %v1069 = vadd.f32 %v1067, %v1068
    %v1070 = vsel %vm878, %v1007, 0.0
    %v1071 = vadd.f32 %v1069, %v1070
    %v1072 = vsel %vm878, %v1008, 0.0
    %v1073 = vadd.f32 %v1071, %v1072
    %v1074 = vsel %vm878, %v1009, 0.0
    %v1075 = vadd.f32 %v1073, %v1074
    %v1076 = vsel %vm878, %v1010, 0.0
    %v1077 = vadd.f32 %v1075, %v1076
    %v1078 = vsel %vm878, %v1011, 0.0
    %v1079 = vadd.f32 %v1077, %v1078
    %v1080 = vsel %vm878, %v1012, 0.0
    %v1081 = vadd.f32 %v1079, %v1080
    %v1082 = vsel %vm878, %v1013, 0.0
    %v1083 = vadd.f32 %v1081, %v1082
    %v1084 = vsel %vm878, %v1014, 0.0
    %v1085 = vadd.f32 %v1083, %v1084
    %v1086 = vsel %vm878, %v1015, 0.0
    %v1087 = vadd.f32 %v1085, %v1086
    %v1088 = vsel %vm878, %v1016, 0.0
    %v1089 = vadd.f32 %v1087, %v1088
    %v1090 = vsel %vm878, %v1017, 0.0
    %v1091 = vadd.f32 %v1089, %v1090
    %v1092 = vsel %vm878, %v1018, 0.0
    %v1093 = vadd.f32 %v1091, %v1092
    %v1094 = vsel %vm878, %v1019, 0.0
    %v1095 = vadd.f32 %v1093, %v1094
    %v1096 = vsel %vm878, %v1020, 0.0
    %v1097 = vadd.f32 %v1095, %v1096
    %v1098 = vsel %vm878, %v1021, 0.0
    %v1099 = vadd.f32 %v1097, %v1098
    %v1100 = vsel %vm878, %v1022, 0.0
    %v1101 = vadd.f32 %v1099, %v1100
    %v1102 = vsel %vm878, %v1023, 0.0
    %v1103 = vadd.f32 %v1101, %v1102
    %v1104 = vsel %vm878, %v1024, 0.0
    %v1105 = vadd.f32 %v1103, %v1104
    %v1106 = vsel %vm878, %v1025, 0.0
    %v1107 = vadd.f32 %v1105, %v1106
    %v1108 = vsel %vm878, %v1026, 0.0
    %v1109 = vadd.f32 %v1107, %v1108
    %v1110 = vsel %vm878, %v1027, 0.0
    %v1111 = vadd.f32 %v1109, %v1110
    %v1112 = vsel %vm878, %v1028, 0.0
    %v1113 = vadd.f32 %v1111, %v1112
    %v1114 = vsel %vm878, %v1029, 0.0
    %v1115 = vadd.f32 %v1113, %v1114
    %v1116 = vsel %vm878, %v1030, 0.0
    %v1117 = vadd.f32 %v1115, %v1116
    %v1118 = vsel %vm878, %v1031, 0.0
    %v1119 = vadd.f32 %v1117, %v1118
    %v1120 = vsel %vm878, %v1032, 0.0
    %v1121 = vadd.f32 %v1119, %v1120
    %v1122 = vsel %vm878, %v1033, 0.0
    %v1123 = vadd.f32 %v1121, %v1122
    %v1124 = vsel %vm878, %v1034, 0.0
    %v1125 = vadd.f32 %v1123, %v1124
    %v1126 = vsel %vm878, %v1035, 0.0
    %v1127 = vadd.f32 %v1125, %v1126
    %v1128 = vsel %vm878, %v1036, 0.0
    %v1129 = vadd.f32 %v1127, %v1128
    %v1130 = vsel %vm878, %v1037, 0.0
    %v1131 = vadd.f32 %v1129, %v1130
    %v1132 = vsel %vm878, %v1038, 0.0
    %v1133 = vadd.f32 %v1131, %v1132
    %v1134 = vsel %vm878, %v1039, 0.0
    %v1135 = vadd.f32 %v1133, %v1134
    %v1136 = vsel %vm878, %v1040, 0.0
    %v1137 = vadd.f32 %v1135, %v1136
    %v1138 = vsel %vm878, %v1041, 0.0
    %v1139 = vadd.f32 %v1137, %v1138
    %v1140 = vsel %vm878, %v1042, 0.0
    %v1141 = vadd.f32 %v1139, %v1140
    %v1142 = vsel %vm878, %v1043, 0.0
    %v1143 = vadd.f32 %v1141, %v1142
    %v1144 = vsel %vm878, %v1044, 0.0
    %v1145 = vadd.f32 %v1143, %v1144
    %v1146 = vsel %vm878, %v1045, 0.0
    %v1147 = vadd.f32 %v1145, %v1146
    %v1148 = vsel %vm878, %v1046, 0.0
    %v1149 = vadd.f32 %v1147, %v1148
    %v1150 = vsel %vm878, %v1047, 0.0
    %v1151 = vadd.f32 %v1149, %v1150
    %v1152 = vsel %vm878, %v1048, 0.0
    %v1153 = vadd.f32 %v1151, %v1152
    %v1154 = vsel %vm878, %v1049, 0.0
    %v1155 = vadd.f32 %v1153, %v1154
    %v1156 = vsel %vm878, %v1050, 0.0
    %v1157 = vadd.f32 %v1155, %v1156
    %v1158 = vsel %vm878, %v1051, 0.0
    %v1159 = vadd.f32 %v1157, %v1158
    %v1160 = vsel %vm878, %v1052, 0.0
    %v1161 = vadd.f32 %v1159, %v1160
    %v1162 = vsel %vm878, %v1053, 0.0
    %v1163 = vadd.f32 %v1161, %v1162
    %v1164 = vsel %vm878, %v1054, 0.0
    %v1165 = vadd.f32 %v1163, %v1164
    %v1166 = vsel %vm878, %v1055, 0.0
    %v1167 = vadd.f32 %v1165, %v1166
    %v1168 = vsel %vm878, %v1056, 0.0
    %v1169 = vadd.f32 %v1167, %v1168
    %v1170 = vrot.slane %v1169, 4
    %v1171 = vadd.f32 %v1169, %v1170
    %v1172 = vrot.slane %v1171, 2
    %v1173 = vadd.f32 %v1171, %v1172
    %v1174 = vrot.slane %v1173, 1
    %v1175 = vadd.f32 %v1173, %v1174
    %1176 = vst.msk [vmem:[#allocation4] sm:$0x1] %vm998, %v1175
    // Predicated region
    $region10: #{tpu_custom_call.1} parent=1 // pred_check
      _
    $region11: #{tpu_custom_call.1} parent=1 // pred_check_branch
      %1178 = sbr.rel (0) target = $region13
    $region12: #{tpu_custom_call.1} parent=1 // pred_region
      _
    $region13: #{tpu_custom_call.1} parent=1 // pred_fallthru
      _
    // Predicated region
    $region14: #{tpu_custom_call.1} parent=1 // pred_check
      _
    $region15: #{tpu_custom_call.1} parent=1 // pred_check_branch
      %1180 = sbr.rel (0) target = $region17
    $region16: #{tpu_custom_call.1} parent=1 // pred_region
      %s1182 = ssub.s32 16, 16
      %1183 = vsyncadd [#allocation3], %s1182
      %s1185 = sshll.u32 [#allocation2], 4
      %s1186 = int_to_ptr.vmem [resolvable:$true] %s1185
      %1188 = dma.vmem_to_hbm [thread:$0]  %s1186, 16, %s3, [#allocation3]
    $region17: #{tpu_custom_call.1} parent=1 // pred_fallthru
      _
    // Predicated region
    $region18: #{tpu_custom_call.1} parent=1 // pred_check
      _
    $region19: #{tpu_custom_call.1} parent=1 // pred_check_branch
      %1190 = sbr.rel (0) target = $region21
    $region20: #{tpu_custom_call.1} parent=1 // pred_region
      %s1192 = ssub.s32 16, 16
      %1193 = vsyncadd [#allocation5], %s1192
      %s1195 = sshll.u32 [#allocation4], 4
      %s1196 = int_to_ptr.vmem [resolvable:$true] %s1195
      %1198 = dma.vmem_to_hbm [thread:$0]  %s1196, 16, %s4, [#allocation5]
    $region21: #{tpu_custom_call.1} parent=1 // pred_fallthru
      _
    // Predicated region
    $region22: #{tpu_custom_call.1} parent=1 // pred_check
      _
    $region23: #{tpu_custom_call.1} parent=1 // pred_check_branch
      %1200 = sbr.rel (0) target = $region25
    $region24: #{tpu_custom_call.1} parent=1 // pred_region
      _
    $region25: #{tpu_custom_call.1} parent=1 // pred_fallthru
      _
    // Predicated region
    $region26: #{tpu_custom_call.1} parent=1 // pred_check
      _
    $region27: #{tpu_custom_call.1} parent=1 // pred_check_branch
      %1202 = sbr.rel (0) target = $region29
    $region28: #{tpu_custom_call.1} parent=1 // pred_region
      %1203 = dma.done [#allocation3], 16
    $region29: #{tpu_custom_call.1} parent=1 // pred_fallthru
      _
    // Predicated region
    $region30: #{tpu_custom_call.1} parent=1 // pred_check
      _
    $region31: #{tpu_custom_call.1} parent=1 // pred_check_branch
      %1205 = sbr.rel (0) target = $region33
    $region32: #{tpu_custom_call.1} parent=1 // pred_region
      %1206 = dma.done [#allocation5], 16
    $region33: #{tpu_custom_call.1} parent=1 // pred_fallthru
      _
    %1207 = vsyncpa [#allocation3], 1
    %1208 = vsyncpa [#allocation5], 1

</llo_original>
